<compile_context>
chip_gen: v7x
topology: tpu7x:2x2x1
jax: 0.10.0
libtpu: 0.0.40
codegen_flags: <defaults>
</compile_context>

<pallas_src>
import jax
import jax.numpy as jnp
from jax.experimental import pallas as pl
from jax.experimental.pallas import tpu as pltpu

LANE_PAD = 128  # lane-dense padded width for the final output store


# ----------------------------------------------------------------------------
# Fused Pallas kernel
# ----------------------------------------------------------------------------
def make_fused_kernel(num_layers):
    """Fused forward: num_layers GRU steps (h0 == 0, seq_len == 1) + relu(fc1) + fc2.

    Ref layout (all whole-array VMEM blocks):
      refs[0]                 : x   (B, D_in)
      per layer (7 refs each) : w_r (d_in,H), w_z (d_in,H), w_n (d_in,H),
                                b_r (1,H), b_z (1,H), b_in (1,H), b_hn (1,H)
      head (4 refs)           : w1 (H,64), b1 (1,64), w2 (64,LANE_PAD), b2 (1,LANE_PAD)
      refs[-1]                : out (B, LANE_PAD)
    """

    def kernel(*refs):
        x_ref = refs[0]
        out_ref = refs[-1]
        p = refs[1:-1]

        h = x_ref[...]
        idx = 0
        for _ in range(num_layers):
            w_r, w_z, w_n, b_r, b_z, b_in, b_hn = p[idx:idx + 7]
            idx += 7
            # With h0 == 0 the W_hh @ h contribution vanishes:
            #   r  = sigmoid(x W_ir + b_ir + b_hr)
            #   z  = sigmoid(x W_iz + b_iz + b_hz)
            #   n  = tanh  (x W_in + b_in + r * b_hn)
            #   h' = (1 - z) * n               (z * h0 == 0)
            r = jax.nn.sigmoid(
                jnp.dot(h, w_r[...], preferred_element_type=jnp.float32) + b_r[...])
            z = jax.nn.sigmoid(
                jnp.dot(h, w_z[...], preferred_element_type=jnp.float32) + b_z[...])
            n = jnp.tanh(
                jnp.dot(h, w_n[...], preferred_element_type=jnp.float32)
                + b_in[...] + r * b_hn[...])
            h = (1.0 - z) * n

        w1, b1, w2, b2 = p[idx:idx + 4]
        a = jnp.maximum(
            jnp.dot(h, w1[...], preferred_element_type=jnp.float32) + b1[...], 0.0)
        out_ref[...] = (
            jnp.dot(a, w2[...], preferred_element_type=jnp.float32) + b2[...])

    return kernel


# ----------------------------------------------------------------------------
# Parameters (deterministic init mimicking PyTorch uniform(-1/sqrt(H), +))
# kept in the original PyTorch layout so the pure-JAX reference uses the
# full (unsimplified) GRU equations.
# ----------------------------------------------------------------------------
def init_params(key, input_dim, hidden_dim, num_layers):
    params = {"gru": []}
    kgru = 1.0 / jnp.sqrt(hidden_dim)
    for layer in range(num_layers):
        d_in = input_dim if layer == 0 else hidden_dim
        key, k1, k2, k3, k4 = jax.random.split(key, 5)
        w_ih = jax.random.uniform(k1, (3 * hidden_dim, d_in), jnp.float32, -kgru, kgru)
        w_hh = jax.random.uniform(k2, (3 * hidden_dim, hidden_dim), jnp.float32, -kgru, kgru)
        b_ih = jax.random.uniform(k3, (1, 3 * hidden_dim), jnp.float32, -kgru, kgru)
        b_hh = jax.random.uniform(k4, (1, 3 * hidden_dim), jnp.float32, -kgru, kgru)
        params["gru"].append((w_ih, w_hh, b_ih, b_hh))

    key, k1, k2, k3, k4 = jax.random.split(key, 5)
    k_fc1 = 1.0 / jnp.sqrt(hidden_dim)
    k_fc2 = 1.0 / jnp.sqrt(64.0)
    params["fc1_w"] = jax.random.uniform(k1, (64, hidden_dim), jnp.float32, -k_fc1, k_fc1)
    params["fc1_b"] = jax.random.uniform(k2, (1, 64), jnp.float32, -k_fc1, k_fc1)
    params["fc2_w"] = jax.random.uniform(k3, (5, 64), jnp.float32, -k_fc2, k_fc2)
    params["fc2_b"] = jax.random.uniform(k4, (1, 5), jnp.float32, -k_fc2, k_fc2)
    return params


def pack_params(params, hidden_dim, output_dim, num_layers):
    """Pre-transpose / split weights into the kernel's flat layout.

    Per layer (PyTorch gate order r, z, n):
      W_ir.T, W_iz.T, W_in.T                    : (d_in, H)
      b_ir + b_hr, b_iz + b_hz, b_in, b_hn      : (1, H)
    Head:
      fc1_w.T (H, 64), fc1_b (1, 64),
      fc2_w.T zero-padded to (64, LANE_PAD), fc2_b zero-padded to (1, LANE_PAD)
    w_hh is intentionally NOT packed (h0 == 0 makes it dead work).
    """
    H = hidden_dim
    flat = []
    for layer in range(num_layers):
        w_ih, _w_hh, b_ih, b_hh = params["gru"][layer]
        flat += [
            jnp.asarray(w_ih[0 * H:1 * H].T),                    # reset gate
            jnp.asarray(w_ih[1 * H:2 * H].T),                    # update gate
            jnp.asarray(w_ih[2 * H:3 * H].T),                    # new gate
            b_ih[:, 0 * H:1 * H] + b_hh[:, 0 * H:1 * H],
            b_ih[:, 1 * H:2 * H] + b_hh[:, 1 * H:2 * H],
            b_ih[:, 2 * H:3 * H],
            b_hh[:, 2 * H:3 * H],
        ]
    w2_t = params["fc2_w"].T                                     # (64, output_dim)
    w2_pad = jnp.zeros((w2_t.shape[0], LANE_PAD), jnp.float32).at[:, :output_dim].set(w2_t)
    b2_pad = jnp.zeros((1, LANE_PAD), jnp.float32).at[:, :output_dim].set(params["fc2_b"])
    flat += [jnp.asarray(params["fc1_w"].T), params["fc1_b"], w2_pad, b2_pad]
    return flat


# ----------------------------------------------------------------------------
# Forward pass: single fused pallas_call (no grid; everything fits in VMEM)
# ----------------------------------------------------------------------------
def rnn_forward(x, packed, input_dim, hidden_dim, output_dim, num_layers):
    x = x.reshape(-1, input_dim).astype(jnp.float32)   # == view(-1, 1, input_dim)
    B = x.shape[0]
    flat_inputs = [x] + list(packed)
    vmem = lambda: pl.BlockSpec(memory_space=pltpu.MemorySpace.VMEM)

    # TODO(synk): for large batches, tile B with a ('parallel',) grid axis so
    # both v7x TensorCores are used; at B=8 a single whole-array block is best.
    out_padded = pl.pallas_call(
        make_fused_kernel(num_layers),
        in_specs=[vmem() for _ in flat_inputs],
        out_specs=vmem(),
        out_shape=jax.ShapeDtypeStruct((B, LANE_PAD), jnp.float32),
    )(*flat_inputs)
    return out_padded[:, :output_dim]


# ----------------------------------------------------------------------------
# Pure-JAX reference (full PyTorch GRU equations, including the W_hh path
# against a zero h0) for correctness checking of the simplified kernel.
# ----------------------------------------------------------------------------
def rnn_forward_ref(x, params, input_dim, hidden_dim, num_layers):
    x = x.reshape(-1, input_dim).astype(jnp.float32)
    B = x.shape[0]
    u = x
    for layer in range(num_layers):
        w_ih, w_hh, b_ih, b_hh = params["gru"][layer]
        h = jnp.zeros((B, hidden_dim), jnp.float32)
        gi = u @ w_ih.T + b_ih
        gh = h @ w_hh.T + b_hh
        H = hidden_dim
        r = jax.nn.sigmoid(gi[:, :H] + gh[:, :H])
        z = jax.nn.sigmoid(gi[:, H:2 * H] + gh[:, H:2 * H])
        n = jnp.tanh(gi[:, 2 * H:] + r * gh[:, 2 * H:])
        u = (1.0 - z) * n + z * h
    a = jnp.maximum(u @ params["fc1_w"].T + params["fc1_b"], 0.0)
    return a @ params["fc2_w"].T + params["fc2_b"]


if __name__ == "__main__":
    INPUT_DIM, HIDDEN_DIM, OUTPUT_DIM, NUM_LAYERS = 16, 32, 5, 2
    BATCH = 8

    key = jax.random.PRNGKey(0)
    kp, kx = jax.random.split(key)
    params = init_params(kp, INPUT_DIM, HIDDEN_DIM, NUM_LAYERS)
    packed = pack_params(params, HIDDEN_DIM, OUTPUT_DIM, NUM_LAYERS)
    x = jax.random.normal(kx, (BATCH, INPUT_DIM), jnp.float32)

    out = rnn_forward(x, packed, INPUT_DIM, HIDDEN_DIM, OUTPUT_DIM, NUM_LAYERS)
    out = jax.block_until_ready(out)

    ref = rnn_forward_ref(x, params, INPUT_DIM, HIDDEN_DIM, NUM_LAYERS)
    assert out.shape == (BATCH, OUTPUT_DIM), out.shape
    assert jnp.allclose(out, ref, rtol=1e-4, atol=1e-4), "mismatch vs reference"

    print("KERNEL_OK")
</pallas_src>

<mosaic_0001>
module attributes {stable_mosaic.version = 11 : i64} {
  func.func @kernel(%arg0: memref<8x16xf32, #tpu.memory_space<vmem>>, %arg1: memref<16x32xf32, #tpu.memory_space<vmem>>, %arg2: memref<16x32xf32, #tpu.memory_space<vmem>>, %arg3: memref<16x32xf32, #tpu.memory_space<vmem>>, %arg4: memref<1x32xf32, #tpu.memory_space<vmem>>, %arg5: memref<1x32xf32, #tpu.memory_space<vmem>>, %arg6: memref<1x32xf32, #tpu.memory_space<vmem>>, %arg7: memref<1x32xf32, #tpu.memory_space<vmem>>, %arg8: memref<32x32xf32, #tpu.memory_space<vmem>>, %arg9: memref<32x32xf32, #tpu.memory_space<vmem>>, %arg10: memref<32x32xf32, #tpu.memory_space<vmem>>, %arg11: memref<1x32xf32, #tpu.memory_space<vmem>>, %arg12: memref<1x32xf32, #tpu.memory_space<vmem>>, %arg13: memref<1x32xf32, #tpu.memory_space<vmem>>, %arg14: memref<1x32xf32, #tpu.memory_space<vmem>>, %arg15: memref<32x64xf32, #tpu.memory_space<vmem>>, %arg16: memref<1x64xf32, #tpu.memory_space<vmem>>, %arg17: memref<64x128xf32, #tpu.memory_space<vmem>>, %arg18: memref<1x128xf32, #tpu.memory_space<vmem>>, %arg19: memref<8x128xf32, #tpu.memory_space<vmem>>) attributes {dimension_semantics = [], scalar_prefetch = 0 : i64, scratch_operands = 0 : i64, tpu.core_type = #tpu.core_type<tc>} {
    %c0 = arith.constant 0 : index
    %c0_0 = arith.constant 0 : index
    %0 = vector.load %arg0[%c0, %c0_0] : memref<8x16xf32, #tpu.memory_space<vmem>>, vector<8x16xf32>
    %c0_1 = arith.constant 0 : index
    %c0_2 = arith.constant 0 : index
    %1 = vector.load %arg1[%c0_1, %c0_2] : memref<16x32xf32, #tpu.memory_space<vmem>>, vector<16x32xf32>
    %cst = arith.constant dense<0.000000e+00> : vector<8x32xf32>
    %2 = tpu.matmul %0, %1, %cst {dimension_numbers = #tpu.dot_dimension_numbers<[1], [0], [0], [1], [0, 0, 1, 1], [], []>} : vector<8x16xf32>, vector<16x32xf32>, vector<8x32xf32> -> vector<8x32xf32>
    %c0_3 = arith.constant 0 : index
    %c0_4 = arith.constant 0 : index
    %3 = vector.load %arg4[%c0_3, %c0_4] : memref<1x32xf32, #tpu.memory_space<vmem>>, vector<1x32xf32>
    %4 = vector.broadcast %3 : vector<1x32xf32> to vector<8x32xf32>
    %5 = arith.addf %2, %4 : vector<8x32xf32>
    %6 = arith.negf %5 : vector<8x32xf32>
    %7 = math.exp %6 : vector<8x32xf32>
    %cst_5 = arith.constant 1.000000e+00 : f32
    %8 = vector.broadcast %cst_5 : f32 to vector<8x32xf32>
    %9 = arith.addf %8, %7 : vector<8x32xf32>
    %10 = arith.divf %8, %9 : vector<8x32xf32>
    %c0_6 = arith.constant 0 : index
    %c0_7 = arith.constant 0 : index
    %11 = vector.load %arg2[%c0_6, %c0_7] : memref<16x32xf32, #tpu.memory_space<vmem>>, vector<16x32xf32>
    %cst_8 = arith.constant dense<0.000000e+00> : vector<8x32xf32>
    %12 = tpu.matmul %0, %11, %cst_8 {dimension_numbers = #tpu.dot_dimension_numbers<[1], [0], [0], [1], [0, 0, 1, 1], [], []>} : vector<8x16xf32>, vector<16x32xf32>, vector<8x32xf32> -> vector<8x32xf32>
    %c0_9 = arith.constant 0 : index
    %c0_10 = arith.constant 0 : index
    %13 = vector.load %arg5[%c0_9, %c0_10] : memref<1x32xf32, #tpu.memory_space<vmem>>, vector<1x32xf32>
    %14 = vector.broadcast %13 : vector<1x32xf32> to vector<8x32xf32>
    %15 = arith.addf %12, %14 : vector<8x32xf32>
    %16 = arith.negf %15 : vector<8x32xf32>
    %17 = math.exp %16 : vector<8x32xf32>
    %cst_11 = arith.constant 1.000000e+00 : f32
    %18 = vector.broadcast %cst_11 : f32 to vector<8x32xf32>
    %19 = arith.addf %18, %17 : vector<8x32xf32>
    %20 = arith.divf %18, %19 : vector<8x32xf32>
    %c0_12 = arith.constant 0 : index
    %c0_13 = arith.constant 0 : index
    %21 = vector.load %arg3[%c0_12, %c0_13] : memref<16x32xf32, #tpu.memory_space<vmem>>, vector<16x32xf32>
    %cst_14 = arith.constant dense<0.000000e+00> : vector<8x32xf32>
    %22 = tpu.matmul %0, %21, %cst_14 {dimension_numbers = #tpu.dot_dimension_numbers<[1], [0], [0], [1], [0, 0, 1, 1], [], []>} : vector<8x16xf32>, vector<16x32xf32>, vector<8x32xf32> -> vector<8x32xf32>
    %c0_15 = arith.constant 0 : index
    %c0_16 = arith.constant 0 : index
    %23 = vector.load %arg6[%c0_15, %c0_16] : memref<1x32xf32, #tpu.memory_space<vmem>>, vector<1x32xf32>
    %24 = vector.broadcast %23 : vector<1x32xf32> to vector<8x32xf32>
    %25 = arith.addf %22, %24 : vector<8x32xf32>
    %c0_17 = arith.constant 0 : index
    %c0_18 = arith.constant 0 : index
    %26 = vector.load %arg7[%c0_17, %c0_18] : memref<1x32xf32, #tpu.memory_space<vmem>>, vector<1x32xf32>
    %27 = vector.broadcast %26 : vector<1x32xf32> to vector<8x32xf32>
    %28 = arith.mulf %10, %27 : vector<8x32xf32>
    %29 = arith.addf %25, %28 : vector<8x32xf32>
    %30 = math.tanh %29 : vector<8x32xf32>
    %cst_19 = arith.constant 1.000000e+00 : f32
    %31 = vector.broadcast %cst_19 : f32 to vector<8x32xf32>
    %32 = arith.subf %31, %20 : vector<8x32xf32>
    %33 = arith.mulf %32, %30 : vector<8x32xf32>
    %c0_20 = arith.constant 0 : index
    %c0_21 = arith.constant 0 : index
    %34 = vector.load %arg8[%c0_20, %c0_21] : memref<32x32xf32, #tpu.memory_space<vmem>>, vector<32x32xf32>
    %cst_22 = arith.constant dense<0.000000e+00> : vector<8x32xf32>
    %35 = tpu.matmul %33, %34, %cst_22 {dimension_numbers = #tpu.dot_dimension_numbers<[1], [0], [0], [1], [0, 0, 1, 1], [], []>} : vector<8x32xf32>, vector<32x32xf32>, vector<8x32xf32> -> vector<8x32xf32>
    %c0_23 = arith.constant 0 : index
    %c0_24 = arith.constant 0 : index
    %36 = vector.load %arg11[%c0_23, %c0_24] : memref<1x32xf32, #tpu.memory_space<vmem>>, vector<1x32xf32>
    %37 = vector.broadcast %36 : vector<1x32xf32> to vector<8x32xf32>
    %38 = arith.addf %35, %37 : vector<8x32xf32>
    %39 = arith.negf %38 : vector<8x32xf32>
    %40 = math.exp %39 : vector<8x32xf32>
    %cst_25 = arith.constant 1.000000e+00 : f32
    %41 = vector.broadcast %cst_25 : f32 to vector<8x32xf32>
    %42 = arith.addf %41, %40 : vector<8x32xf32>
    %43 = arith.divf %41, %42 : vector<8x32xf32>
    %c0_26 = arith.constant 0 : index
    %c0_27 = arith.constant 0 : index
    %44 = vector.load %arg9[%c0_26, %c0_27] : memref<32x32xf32, #tpu.memory_space<vmem>>, vector<32x32xf32>
    %cst_28 = arith.constant dense<0.000000e+00> : vector<8x32xf32>
    %45 = tpu.matmul %33, %44, %cst_28 {dimension_numbers = #tpu.dot_dimension_numbers<[1], [0], [0], [1], [0, 0, 1, 1], [], []>} : vector<8x32xf32>, vector<32x32xf32>, vector<8x32xf32> -> vector<8x32xf32>
    %c0_29 = arith.constant 0 : index
    %c0_30 = arith.constant 0 : index
    %46 = vector.load %arg12[%c0_29, %c0_30] : memref<1x32xf32, #tpu.memory_space<vmem>>, vector<1x32xf32>
    %47 = vector.broadcast %46 : vector<1x32xf32> to vector<8x32xf32>
    %48 = arith.addf %45, %47 : vector<8x32xf32>
    %49 = arith.negf %48 : vector<8x32xf32>
    %50 = math.exp %49 : vector<8x32xf32>
    %cst_31 = arith.constant 1.000000e+00 : f32
    %51 = vector.broadcast %cst_31 : f32 to vector<8x32xf32>
    %52 = arith.addf %51, %50 : vector<8x32xf32>
    %53 = arith.divf %51, %52 : vector<8x32xf32>
    %c0_32 = arith.constant 0 : index
    %c0_33 = arith.constant 0 : index
    %54 = vector.load %arg10[%c0_32, %c0_33] : memref<32x32xf32, #tpu.memory_space<vmem>>, vector<32x32xf32>
    %cst_34 = arith.constant dense<0.000000e+00> : vector<8x32xf32>
    %55 = tpu.matmul %33, %54, %cst_34 {dimension_numbers = #tpu.dot_dimension_numbers<[1], [0], [0], [1], [0, 0, 1, 1], [], []>} : vector<8x32xf32>, vector<32x32xf32>, vector<8x32xf32> -> vector<8x32xf32>
    %c0_35 = arith.constant 0 : index
    %c0_36 = arith.constant 0 : index
    %56 = vector.load %arg13[%c0_35, %c0_36] : memref<1x32xf32, #tpu.memory_space<vmem>>, vector<1x32xf32>
    %57 = vector.broadcast %56 : vector<1x32xf32> to vector<8x32xf32>
    %58 = arith.addf %55, %57 : vector<8x32xf32>
    %c0_37 = arith.constant 0 : index
    %c0_38 = arith.constant 0 : index
    %59 = vector.load %arg14[%c0_37, %c0_38] : memref<1x32xf32, #tpu.memory_space<vmem>>, vector<1x32xf32>
    %60 = vector.broadcast %59 : vector<1x32xf32> to vector<8x32xf32>
    %61 = arith.mulf %43, %60 : vector<8x32xf32>
    %62 = arith.addf %58, %61 : vector<8x32xf32>
    %63 = math.tanh %62 : vector<8x32xf32>
    %cst_39 = arith.constant 1.000000e+00 : f32
    %64 = vector.broadcast %cst_39 : f32 to vector<8x32xf32>
    %65 = arith.subf %64, %53 : vector<8x32xf32>
    %66 = arith.mulf %65, %63 : vector<8x32xf32>
    %c0_40 = arith.constant 0 : index
    %c0_41 = arith.constant 0 : index
    %67 = vector.load %arg15[%c0_40, %c0_41] : memref<32x64xf32, #tpu.memory_space<vmem>>, vector<32x64xf32>
    %cst_42 = arith.constant dense<0.000000e+00> : vector<8x64xf32>
    %68 = tpu.matmul %66, %67, %cst_42 {dimension_numbers = #tpu.dot_dimension_numbers<[1], [0], [0], [1], [0, 0, 1, 1], [], []>} : vector<8x32xf32>, vector<32x64xf32>, vector<8x64xf32> -> vector<8x64xf32>
    %c0_43 = arith.constant 0 : index
    %c0_44 = arith.constant 0 : index
    %69 = vector.load %arg16[%c0_43, %c0_44] : memref<1x64xf32, #tpu.memory_space<vmem>>, vector<1x64xf32>
    %70 = vector.broadcast %69 : vector<1x64xf32> to vector<8x64xf32>
    %71 = arith.addf %68, %70 : vector<8x64xf32>
    %cst_45 = arith.constant 0.000000e+00 : f32
    %72 = vector.broadcast %cst_45 : f32 to vector<8x64xf32>
    %73 = arith.maximumf %71, %72 : vector<8x64xf32>
    %c0_46 = arith.constant 0 : index
    %c0_47 = arith.constant 0 : index
    %74 = vector.load %arg17[%c0_46, %c0_47] : memref<64x128xf32, #tpu.memory_space<vmem>>, vector<64x128xf32>
    %cst_48 = arith.constant dense<0.000000e+00> : vector<8x128xf32>
    %75 = tpu.matmul %73, %74, %cst_48 {dimension_numbers = #tpu.dot_dimension_numbers<[1], [0], [0], [1], [0, 0, 1, 1], [], []>} : vector<8x64xf32>, vector<64x128xf32>, vector<8x128xf32> -> vector<8x128xf32>
    %c0_49 = arith.constant 0 : index
    %c0_50 = arith.constant 0 : index
    %76 = vector.load %arg18[%c0_49, %c0_50] : memref<1x128xf32, #tpu.memory_space<vmem>>, vector<1x128xf32>
    %77 = vector.broadcast %76 : vector<1x128xf32> to vector<8x128xf32>
    %78 = arith.addf %75, %77 : vector<8x128xf32>
    %c0_51 = arith.constant 0 : index
    %c0_52 = arith.constant 0 : index
    %79 = vector.load %arg19[%c0_51, %c0_52] : memref<8x128xf32, #tpu.memory_space<vmem>>, vector<8x128xf32>
    tpu.vector_store %arg19[%c0_51, %c0_52], %78 {strides = array<i32>} : memref<8x128xf32, #tpu.memory_space<vmem>>, vector<8x128xf32>,
    return
  }
}

</mosaic_0001>

<llo_original>
// kernel: tpu_custom_call.1
$region0: #{tpu_custom_call.1}
  #allocation0 [shape = 'u32[]', space=smem, size = 0x4, offset = 0x4, fixed_abs, tag = 'smem constant byte address 0x4 - core index']
  #allocation1 [shape = 'u32[144,128]{1,0:T(1,128)}', space=vmem, size = 0x12000, scoped, tag = 'internal scratch']
  %s0 = inlined_call_operand.hbm [shape: f32[8,16], index: 0, kind: input, shape index: {}]
  %s1 = inlined_call_operand.hbm [shape: f32[16,32], index: 1, kind: input, shape index: {}]
  %s2 = inlined_call_operand.hbm [shape: f32[16,32], index: 2, kind: input, shape index: {}]
  %s3 = inlined_call_operand.hbm [shape: f32[16,32], index: 3, kind: input, shape index: {}]
  %s4 = inlined_call_operand.hbm [shape: f32[1,32], index: 4, kind: input, shape index: {}]
  %s5 = inlined_call_operand.hbm [shape: f32[1,32], index: 5, kind: input, shape index: {}]
  %s6 = inlined_call_operand.hbm [shape: f32[1,32], index: 6, kind: input, shape index: {}]
  %s7 = inlined_call_operand.hbm [shape: f32[1,32], index: 7, kind: input, shape index: {}]
  %s8 = inlined_call_operand.hbm [shape: f32[32,32], index: 8, kind: input, shape index: {}]
  %s9 = inlined_call_operand.hbm [shape: f32[32,32], index: 9, kind: input, shape index: {}]
  %s10 = inlined_call_operand.hbm [shape: f32[32,32], index: 10, kind: input, shape index: {}]
  %s11 = inlined_call_operand.hbm [shape: f32[1,32], index: 11, kind: input, shape index: {}]
  %s12 = inlined_call_operand.hbm [shape: f32[1,32], index: 12, kind: input, shape index: {}]
  %s13 = inlined_call_operand.hbm [shape: f32[1,32], index: 13, kind: input, shape index: {}]
  %s14 = inlined_call_operand.hbm [shape: f32[1,32], index: 14, kind: input, shape index: {}]
  %s15 = inlined_call_operand.hbm [shape: f32[32,64], index: 15, kind: input, shape index: {}]
  %s16 = inlined_call_operand.hbm [shape: f32[1,64], index: 16, kind: input, shape index: {}]
  %s17 = inlined_call_operand.vmem [shape: f32[64,128], index: 17, kind: input, shape index: {}]
  %s18 = inlined_call_operand.vmem [shape: f32[1,128], index: 18, kind: input, shape index: {}]
  %s19 = inlined_call_operand.hbm [shape: f32[8,128], index: 19, kind: output, shape index: {}]
  %s20 = sld [smem:[#allocation0]]
  $region154: #{tpu_custom_call.1} parent=0
    _
  %s22 = ssub.s32 1, %s20
  %s23 = scalar_select 0, %s22, %s20
  $region1: #{tpu_custom_call.1} parent=0
    #allocation2 [shape = 'u8[4096]{0}', space=vmem, size = 0x1000, scoped, tag = 'input window, operand 0, single buffered']
    #allocation3 [shape = 's32[1]{0}', space=sflag, size = 0x4, scoped, tag = 'scoped memory for tpu_custom_call.1']
    #allocation4 [shape = 's32[1]{0}', space=sflag, size = 0x4, scoped, tag = 'scoped memory for tpu_custom_call.1']
    #allocation5 [shape = 'u8[8192]{0}', space=vmem, size = 0x2000, scoped, tag = 'input window, operand 1, single buffered']
    #allocation6 [shape = 's32[1]{0}', space=sflag, size = 0x4, scoped, tag = 'scoped memory for tpu_custom_call.1']
    #allocation7 [shape = 'u8[8192]{0}', space=vmem, size = 0x2000, scoped, tag = 'input window, operand 2, single buffered']
    #allocation8 [shape = 'u8[8192]{0}', space=vmem, size = 0x2000, scoped, tag = 'input window, operand 3, single buffered']
    #allocation9 [shape = 's32[1]{0}', space=sflag, size = 0x4, scoped, tag = 'scoped memory for tpu_custom_call.1']
    #allocation10 [shape = 'u8[512]{0}', space=vmem, size = 0x400, scoped, tag = 'input window, operand 4, single buffered']
    #allocation11 [shape = 'u8[512]{0}', space=vmem, size = 0x400, scoped, tag = 'input window, operand 5, single buffered']
    #allocation12 [shape = 's32[1]{0}', space=sflag, size = 0x4, scoped, tag = 'scoped memory for tpu_custom_call.1']
    #allocation13 [shape = 'u8[512]{0}', space=vmem, size = 0x400, scoped, tag = 'input window, operand 6, single buffered']
    #allocation14 [shape = 'u8[512]{0}', space=vmem, size = 0x400, scoped, tag = 'input window, operand 7, single buffered']
    #allocation15 [shape = 's32[1]{0}', space=sflag, size = 0x4, scoped, tag = 'scoped memory for tpu_custom_call.1']
    #allocation16 [shape = 'u8[16384]{0}', space=vmem, size = 0x4000, scoped, tag = 'input window, operand 8, single buffered']
    #allocation17 [shape = 'u8[16384]{0}', space=vmem, size = 0x4000, scoped, tag = 'input window, operand 9, single buffered']
    #allocation18 [shape = 's32[1]{0}', space=sflag, size = 0x4, scoped, tag = 'scoped memory for tpu_custom_call.1']
    #allocation19 [shape = 'u8[16384]{0}', space=vmem, size = 0x4000, scoped, tag = 'input window, operand 10, single buffered']
    #allocation20 [shape = 'u8[512]{0}', space=vmem, size = 0x400, scoped, tag = 'input window, operand 11, single buffered']
    #allocation21 [shape = 's32[1]{0}', space=sflag, size = 0x4, scoped, tag = 'scoped memory for tpu_custom_call.1']
    #allocation22 [shape = 'u8[512]{0}', space=vmem, size = 0x400, scoped, tag = 'input window, operand 12, single buffered']
    #allocation23 [shape = 'u8[512]{0}', space=vmem, size = 0x400, scoped, tag = 'input window, operand 13, single buffered']
    #allocation24 [shape = 's32[1]{0}', space=sflag, size = 0x4, scoped, tag = 'scoped memory for tpu_custom_call.1']
    #allocation25 [shape = 'u8[512]{0}', space=vmem, size = 0x400, scoped, tag = 'input window, operand 14, single buffered']
    #allocation26 [shape = 'u8[16384]{0}', space=vmem, size = 0x4000, scoped, tag = 'input window, operand 15, single buffered']
    #allocation27 [shape = 's32[1]{0}', space=sflag, size = 0x4, scoped, tag = 'scoped memory for tpu_custom_call.1']
    #allocation28 [shape = 'u8[512]{0}', space=vmem, size = 0x400, scoped, tag = 'input window, operand 16, single buffered']
    #allocation29 [shape = 'u8[4096]{0}', space=vmem, size = 0x1000, scoped, tag = 'output window, operand 0, single buffered']
    %24 = vsyncpa [#allocation3], 0
    %25 = vsyncpa [#allocation6], 0
    %26 = vsyncpa [#allocation9], 0
    %27 = vsyncpa [#allocation12], 0
    %28 = vsyncpa [#allocation15], 0
    %29 = vsyncpa [#allocation18], 0
    %30 = vsyncpa [#allocation21], 0
    %31 = vsyncpa [#allocation24], 0
    %32 = vsyncpa [#allocation27], 0
    %33 = vsyncpa [#allocation4], 0
    // Predicated region
    $region2: #{tpu_custom_call.1} parent=1 // pred_check
      _
    $region3: #{tpu_custom_call.1} parent=1 // pred_check_branch
      %35 = sbr.rel (0) target = $region5
    $region4: #{tpu_custom_call.1} parent=1 // pred_region
      %s37 = ssub.s32 128, 128
      %38 = vsyncadd [#allocation3], %s37
      %s40 = sshll.u32 [#allocation2], 4
      %s41 = int_to_ptr.vmem [resolvable:$true] %s40
      %43 = dma.hbm_to_vmem [thread:$0]  %s0, 128, %s41, [#allocation3]
    $region5: #{tpu_custom_call.1} parent=1 // pred_fallthru
      _
    // Predicated region
    $region6: #{tpu_custom_call.1} parent=1 // pred_check
      _
    $region7: #{tpu_custom_call.1} parent=1 // pred_check_branch
      %45 = sbr.rel (0) target = $region9
    $region8: #{tpu_custom_call.1} parent=1 // pred_region
      %s47 = ssub.s32 256, 256
      %48 = vsyncadd [#allocation6], %s47
      %s49 = sshll.u32 [#allocation5], 4
      %s50 = int_to_ptr.vmem [resolvable:$true] %s49
      %55 = dma.hbm_to_vmem [thread:$0]  %s1, 256, %s50, [#allocation6], 128, 128, 8
    $region9: #{tpu_custom_call.1} parent=1 // pred_fallthru
      _
    // Predicated region
    $region10: #{tpu_custom_call.1} parent=1 // pred_check
      _
    $region11: #{tpu_custom_call.1} parent=1 // pred_check_branch
      %57 = sbr.rel (0) target = $region13
    $region12: #{tpu_custom_call.1} parent=1 // pred_region
      %s59 = ssub.s32 256, 256
      %60 = vsyncadd [#allocation6], %s59
      %s61 = sshll.u32 [#allocation7], 4
      %s62 = int_to_ptr.vmem [resolvable:$true] %s61
      %67 = dma.hbm_to_vmem [thread:$0]  %s2, 256, %s62, [#allocation6], 128, 128, 8
    $region13: #{tpu_custom_call.1} parent=1 // pred_fallthru
      _
    // Predicated region
    $region14: #{tpu_custom_call.1} parent=1 // pred_check
      _
    $region15: #{tpu_custom_call.1} parent=1 // pred_check_branch
      %69 = sbr.rel (0) target = $region17
    $region16: #{tpu_custom_call.1} parent=1 // pred_region
      %s71 = ssub.s32 256, 256
      %72 = vsyncadd [#allocation9], %s71
      %s73 = sshll.u32 [#allocation8], 4
      %s74 = int_to_ptr.vmem [resolvable:$true] %s73
      %79 = dma.hbm_to_vmem [thread:$0]  %s3, 256, %s74, [#allocation9], 128, 128, 8
    $region17: #{tpu_custom_call.1} parent=1 // pred_fallthru
      _
    // Predicated region
    $region18: #{tpu_custom_call.1} parent=1 // pred_check
      _
    $region19: #{tpu_custom_call.1} parent=1 // pred_check_branch
      %81 = sbr.rel (0) target = $region21
    $region20: #{tpu_custom_call.1} parent=1 // pred_region
      %s83 = ssub.s32 16, 16
      %84 = vsyncadd [#allocation9], %s83
      %s86 = sshll.u32 [#allocation10], 4
      %s87 = int_to_ptr.vmem [resolvable:$true] %s86
      %89 = dma.hbm_to_vmem [thread:$0]  %s4, 16, %s87, [#allocation9]
    $region21: #{tpu_custom_call.1} parent=1 // pred_fallthru
      _
    // Predicated region
    $region22: #{tpu_custom_call.1} parent=1 // pred_check
      _
    $region23: #{tpu_custom_call.1} parent=1 // pred_check_branch
      %91 = sbr.rel (0) target = $region25
    $region24: #{tpu_custom_call.1} parent=1 // pred_region
      %s93 = ssub.s32 16, 16
      %94 = vsyncadd [#allocation12], %s93
      %s96 = sshll.u32 [#allocation11], 4
      %s97 = int_to_ptr.vmem [resolvable:$true] %s96
      %99 = dma.hbm_to_vmem [thread:$0]  %s5, 16, %s97, [#allocation12]
    $region25: #{tpu_custom_call.1} parent=1 // pred_fallthru
      _
    // Predicated region
    $region26: #{tpu_custom_call.1} parent=1 // pred_check
      _
    $region27: #{tpu_custom_call.1} parent=1 // pred_check_branch
      %101 = sbr.rel (0) target = $region29
    $region28: #{tpu_custom_call.1} parent=1 // pred_region
      %s103 = ssub.s32 16, 16
      %104 = vsyncadd [#allocation12], %s103
      %s106 = sshll.u32 [#allocation13], 4
      %s107 = int_to_ptr.vmem [resolvable:$true] %s106
      %109 = dma.hbm_to_vmem [thread:$0]  %s6, 16, %s107, [#allocation12]
    $region29: #{tpu_custom_call.1} parent=1 // pred_fallthru
      _
    // Predicated region
    $region30: #{tpu_custom_call.1} parent=1 // pred_check
      _
    $region31: #{tpu_custom_call.1} parent=1 // pred_check_branch
      %111 = sbr.rel (0) target = $region33
    $region32: #{tpu_custom_call.1} parent=1 // pred_region
      %s113 = ssub.s32 16, 16
      %114 = vsyncadd [#allocation15], %s113
      %s116 = sshll.u32 [#allocation14], 4
      %s117 = int_to_ptr.vmem [resolvable:$true] %s116
      %119 = dma.hbm_to_vmem [thread:$0]  %s7, 16, %s117, [#allocation15]
    $region33: #{tpu_custom_call.1} parent=1 // pred_fallthru
      _
    // Predicated region
    $region34: #{tpu_custom_call.1} parent=1 // pred_check
      _
    $region35: #{tpu_custom_call.1} parent=1 // pred_check_branch
      %121 = sbr.rel (0) target = $region37
    $region36: #{tpu_custom_call.1} parent=1 // pred_region
      %s123 = ssub.s32 512, 512
      %124 = vsyncadd [#allocation15], %s123
      %s125 = sshll.u32 [#allocation16], 4
      %s126 = int_to_ptr.vmem [resolvable:$true] %s125
      %131 = dma.hbm_to_vmem [thread:$0]  %s8, 512, %s126, [#allocation15], 128, 128, 8
    $region37: #{tpu_custom_call.1} parent=1 // pred_fallthru
      _
    // Predicated region
    $region38: #{tpu_custom_call.1} parent=1 // pred_check
      _
    $region39: #{tpu_custom_call.1} parent=1 // pred_check_branch
      %133 = sbr.rel (0) target = $region41
    $region40: #{tpu_custom_call.1} parent=1 // pred_region
      %s135 = ssub.s32 512, 512
      %136 = vsyncadd [#allocation18], %s135
      %s137 = sshll.u32 [#allocation17], 4
      %s138 = int_to_ptr.vmem [resolvable:$true] %s137
      %143 = dma.hbm_to_vmem [thread:$0]  %s9, 512, %s138, [#allocation18], 128, 128, 8
    $region41: #{tpu_custom_call.1} parent=1 // pred_fallthru
      _
    // Predicated region
    $region42: #{tpu_custom_call.1} parent=1 // pred_check
      _
    $region43: #{tpu_custom_call.1} parent=1 // pred_check_branch
      %145 = sbr.rel (0) target = $region45
    $region44: #{tpu_custom_call.1} parent=1 // pred_region
      %s147 = ssub.s32 512, 512
      %148 = vsyncadd [#allocation18], %s147
      %s149 = sshll.u32 [#allocation19], 4
      %s150 = int_to_ptr.vmem [resolvable:$true] %s149
      %155 = dma.hbm_to_vmem [thread:$0]  %s10, 512, %s150, [#allocation18], 128, 128, 8
    $region45: #{tpu_custom_call.1} parent=1 // pred_fallthru
      _
    // Predicated region
    $region46: #{tpu_custom_call.1} parent=1 // pred_check
      _
    $region47: #{tpu_custom_call.1} parent=1 // pred_check_branch
      %157 = sbr.rel (0) target = $region49
    $region48: #{tpu_custom_call.1} parent=1 // pred_region
      %s159 = ssub.s32 16, 16
      %160 = vsyncadd [#allocation21], %s159
      %s162 = sshll.u32 [#allocation20], 4
      %s163 = int_to_ptr.vmem [resolvable:$true] %s162
      %165 = dma.hbm_to_vmem [thread:$0]  %s11, 16, %s163, [#allocation21]
    $region49: #{tpu_custom_call.1} parent=1 // pred_fallthru
      _
    // Predicated region
    $region50: #{tpu_custom_call.1} parent=1 // pred_check
      _
    $region51: #{tpu_custom_call.1} parent=1 // pred_check_branch
      %167 = sbr.rel (0) target = $region53
    $region52: #{tpu_custom_call.1} parent=1 // pred_region
      %s169 = ssub.s32 16, 16
      %170 = vsyncadd [#allocation21], %s169
      %s172 = sshll.u32 [#allocation22], 4
      %s173 = int_to_ptr.vmem [resolvable:$true] %s172
      %175 = dma.hbm_to_vmem [thread:$0]  %s12, 16, %s173, [#allocation21]
    $region53: #{tpu_custom_call.1} parent=1 // pred_fallthru
      _
    // Predicated region
    $region54: #{tpu_custom_call.1} parent=1 // pred_check
      _
    $region55: #{tpu_custom_call.1} parent=1 // pred_check_branch
      %177 = sbr.rel (0) target = $region57
    $region56: #{tpu_custom_call.1} parent=1 // pred_region
      %s179 = ssub.s32 16, 16
      %180 = vsyncadd [#allocation24], %s179
      %s182 = sshll.u32 [#allocation23], 4
      %s183 = int_to_ptr.vmem [resolvable:$true] %s182
      %185 = dma.hbm_to_vmem [thread:$0]  %s13, 16, %s183, [#allocation24]
    $region57: #{tpu_custom_call.1} parent=1 // pred_fallthru
      _
    // Predicated region
    $region58: #{tpu_custom_call.1} parent=1 // pred_check
      _
    $region59: #{tpu_custom_call.1} parent=1 // pred_check_branch
      %187 = sbr.rel (0) target = $region61
    $region60: #{tpu_custom_call.1} parent=1 // pred_region
      %s189 = ssub.s32 16, 16
      %190 = vsyncadd [#allocation24], %s189
      %s192 = sshll.u32 [#allocation25], 4
      %s193 = int_to_ptr.vmem [resolvable:$true] %s192
      %195 = dma.hbm_to_vmem [thread:$0]  %s14, 16, %s193, [#allocation24]
    $region61: #{tpu_custom_call.1} parent=1 // pred_fallthru
      _
    // Predicated region
    $region62: #{tpu_custom_call.1} parent=1 // pred_check
      _
    $region63: #{tpu_custom_call.1} parent=1 // pred_check_branch
      %197 = sbr.rel (0) target = $region65
    $region64: #{tpu_custom_call.1} parent=1 // pred_region
      %s199 = ssub.s32 512, 512
      %200 = vsyncadd [#allocation27], %s199
      %s201 = sshll.u32 [#allocation26], 4
      %s202 = int_to_ptr.vmem [resolvable:$true] %s201
      %207 = dma.hbm_to_vmem [thread:$0]  %s15, 512, %s202, [#allocation27], 128, 128, 8
    $region65: #{tpu_custom_call.1} parent=1 // pred_fallthru
      _
    // Predicated region
    $region66: #{tpu_custom_call.1} parent=1 // pred_check
      _
    $region67: #{tpu_custom_call.1} parent=1 // pred_check_branch
      %209 = sbr.rel (0) target = $region69
    $region68: #{tpu_custom_call.1} parent=1 // pred_region
      %s211 = ssub.s32 16, 16
      %212 = vsyncadd [#allocation27], %s211
      %s214 = sshll.u32 [#allocation28], 4
      %s215 = int_to_ptr.vmem [resolvable:$true] %s214
      %217 = dma.hbm_to_vmem [thread:$0]  %s16, 16, %s215, [#allocation27]
    $region69: #{tpu_custom_call.1} parent=1 // pred_fallthru
      _
    // Predicated region
    $region70: #{tpu_custom_call.1} parent=1 // pred_check
      _
    $region71: #{tpu_custom_call.1} parent=1 // pred_check_branch
      %219 = sbr.rel (0) target = $region73
    $region72: #{tpu_custom_call.1} parent=1 // pred_region
      _
    $region73: #{tpu_custom_call.1} parent=1 // pred_fallthru
      _
    // Predicated region
    $region74: #{tpu_custom_call.1} parent=1 // pred_check
      _
    $region75: #{tpu_custom_call.1} parent=1 // pred_check_branch
      %221 = sbr.rel (0) target = $region77
    $region76: #{tpu_custom_call.1} parent=1 // pred_region
      _
    $region77: #{tpu_custom_call.1} parent=1 // pred_fallthru
      _
    // Predicated region
    $region78: #{tpu_custom_call.1} parent=1 // pred_check
      _
    $region79: #{tpu_custom_call.1} parent=1 // pred_check_branch
      %223 = sbr.rel (0) target = $region81
    $region80: #{tpu_custom_call.1} parent=1 // pred_region
      %224 = dma.done [#allocation3], 128
    $region81: #{tpu_custom_call.1} parent=1 // pred_fallthru
      _
    // Predicated region
    $region82: #{tpu_custom_call.1} parent=1 // pred_check
      _
    $region83: #{tpu_custom_call.1} parent=1 // pred_check_branch
      %226 = sbr.rel (0) target = $region85
    $region84: #{tpu_custom_call.1} parent=1 // pred_region
      %227 = dma.done [#allocation6], 256
    $region85: #{tpu_custom_call.1} parent=1 // pred_fallthru
      _
    // Predicated region
    $region86: #{tpu_custom_call.1} parent=1 // pred_check
      _
    $region87: #{tpu_custom_call.1} parent=1 // pred_check_branch
      %229 = sbr.rel (0) target = $region89
    $region88: #{tpu_custom_call.1} parent=1 // pred_region
      %230 = dma.done [#allocation6], 256
    $region89: #{tpu_custom_call.1} parent=1 // pred_fallthru
      _
    // Predicated region
    $region90: #{tpu_custom_call.1} parent=1 // pred_check
      _
    $region91: #{tpu_custom_call.1} parent=1 // pred_check_branch
      %232 = sbr.rel (0) target = $region93
    $region92: #{tpu_custom_call.1} parent=1 // pred_region
      %233 = dma.done [#allocation9], 256
    $region93: #{tpu_custom_call.1} parent=1 // pred_fallthru
      _
    // Predicated region
    $region94: #{tpu_custom_call.1} parent=1 // pred_check
      _
    $region95: #{tpu_custom_call.1} parent=1 // pred_check_branch
      %235 = sbr.rel (0) target = $region97
    $region96: #{tpu_custom_call.1} parent=1 // pred_region
      %236 = dma.done [#allocation9], 16
    $region97: #{tpu_custom_call.1} parent=1 // pred_fallthru
      _
    // Predicated region
    $region98: #{tpu_custom_call.1} parent=1 // pred_check
      _
    $region99: #{tpu_custom_call.1} parent=1 // pred_check_branch
      %238 = sbr.rel (0) target = $region101
    $region100: #{tpu_custom_call.1} parent=1 // pred_region
      %239 = dma.done [#allocation12], 16
    $region101: #{tpu_custom_call.1} parent=1 // pred_fallthru
      _
    // Predicated region
    $region102: #{tpu_custom_call.1} parent=1 // pred_check
      _
    $region103: #{tpu_custom_call.1} parent=1 // pred_check_branch
      %241 = sbr.rel (0) target = $region105
    $region104: #{tpu_custom_call.1} parent=1 // pred_region
      %242 = dma.done [#allocation12], 16
    $region105: #{tpu_custom_call.1} parent=1 // pred_fallthru
      _
    // Predicated region
    $region106: #{tpu_custom_call.1} parent=1 // pred_check
      _
    $region107: #{tpu_custom_call.1} parent=1 // pred_check_branch
      %244 = sbr.rel (0) target = $region109
    $region108: #{tpu_custom_call.1} parent=1 // pred_region
      %245 = dma.done [#allocation15], 16
    $region109: #{tpu_custom_call.1} parent=1 // pred_fallthru
      _
    // Predicated region
    $region110: #{tpu_custom_call.1} parent=1 // pred_check
      _
    $region111: #{tpu_custom_call.1} parent=1 // pred_check_branch
      %247 = sbr.rel (0) target = $region113
    $region112: #{tpu_custom_call.1} parent=1 // pred_region
      %248 = dma.done [#allocation15], 512
    $region113: #{tpu_custom_call.1} parent=1 // pred_fallthru
      _
    // Predicated region
    $region114: #{tpu_custom_call.1} parent=1 // pred_check
      _
    $region115: #{tpu_custom_call.1} parent=1 // pred_check_branch
      %250 = sbr.rel (0) target = $region117
    $region116: #{tpu_custom_call.1} parent=1 // pred_region
      %251 = dma.done [#allocation18], 512
    $region117: #{tpu_custom_call.1} parent=1 // pred_fallthru
      _
    // Predicated region
    $region118: #{tpu_custom_call.1} parent=1 // pred_check
      _
    $region119: #{tpu_custom_call.1} parent=1 // pred_check_branch
      %253 = sbr.rel (0) target = $region121
    $region120: #{tpu_custom_call.1} parent=1 // pred_region
      %254 = dma.done [#allocation18], 512
    $region121: #{tpu_custom_call.1} parent=1 // pred_fallthru
      _
    // Predicated region
    $region122: #{tpu_custom_call.1} parent=1 // pred_check
      _
    $region123: #{tpu_custom_call.1} parent=1 // pred_check_branch
      %256 = sbr.rel (0) target = $region125
    $region124: #{tpu_custom_call.1} parent=1 // pred_region
      %257 = dma.done [#allocation21], 16
    $region125: #{tpu_custom_call.1} parent=1 // pred_fallthru
      _
    // Predicated region
    $region126: #{tpu_custom_call.1} parent=1 // pred_check
      _
    $region127: #{tpu_custom_call.1} parent=1 // pred_check_branch
      %259 = sbr.rel (0) target = $region129
    $region128: #{tpu_custom_call.1} parent=1 // pred_region
      %260 = dma.done [#allocation21], 16
    $region129: #{tpu_custom_call.1} parent=1 // pred_fallthru
      _
    // Predicated region
    $region130: #{tpu_custom_call.1} parent=1 // pred_check
      _
    $region131: #{tpu_custom_call.1} parent=1 // pred_check_branch
      %262 = sbr.rel (0) target = $region133
    $region132: #{tpu_custom_call.1} parent=1 // pred_region
      %263 = dma.done [#allocation24], 16
    $region133: #{tpu_custom_call.1} parent=1 // pred_fallthru
      _
    // Predicated region
    $region134: #{tpu_custom_call.1} parent=1 // pred_check
      _
    $region135: #{tpu_custom_call.1} parent=1 // pred_check_branch
      %265 = sbr.rel (0) target = $region137
    $region136: #{tpu_custom_call.1} parent=1 // pred_region
      %266 = dma.done [#allocation24], 16
    $region137: #{tpu_custom_call.1} parent=1 // pred_fallthru
      _
    // Predicated region
    $region138: #{tpu_custom_call.1} parent=1 // pred_check
      _
    $region139: #{tpu_custom_call.1} parent=1 // pred_check_branch
      %268 = sbr.rel (0) target = $region141
    $region140: #{tpu_custom_call.1} parent=1 // pred_region
      %269 = dma.done [#allocation27], 512
    $region141: #{tpu_custom_call.1} parent=1 // pred_fallthru
      _
    // Predicated region
    $region142: #{tpu_custom_call.1} parent=1 // pred_check
      _
    $region143: #{tpu_custom_call.1} parent=1 // pred_check_branch
      %271 = sbr.rel (0) target = $region145
    $region144: #{tpu_custom_call.1} parent=1 // pred_region
      %272 = dma.done [#allocation27], 16
    $region145: #{tpu_custom_call.1} parent=1 // pred_fallthru
      _
    %v273 = vld [vmem:[#allocation2] sm:$0xff]
    %v274 = vld [vmem:[#allocation5] sm:$0xff]
    %v275 = vld [vmem:[#allocation5 + $0x8] sm:$0xff]
    %v276 = vld [vmem:[#allocation10] sm:$0x1]
    %v278 = vlaneseq
    %v279 = vshrl.u32 %v278, 7
    %v280 = vsub.s32 0, %v279
    %v281 = vrot.slane %v276, %v280
    %vm283 = vcmask 130048
    %v285 = vsel %vm283, %v273, 0
    %287 = vmatprep.subr.mxu0 0.0
    %288 = vmatpush1.msra.mxu0 %v274
    %289 = vmatprep.subr.mxu0 0.0
    %290 = vmatpush1.msra.mxu0 %v275
    %291 = vmatprep.subr.mxu0 0.0
    %292 = vmatpush1.msra.mxu0 0.0
    %293 = vmatprep.subr.mxu0 0.0
    %294 = vmatpush1.msra.mxu0 0.0
    %295 = vmatprep.subr.mxu0 0.0
    %296 = vmatpush1.msra.mxu0 0.0
    %297 = vmatprep.subr.mxu0 0.0
    %298 = vmatpush1.msra.mxu0 0.0
    %299 = vmatprep.subr.mxu0 0.0
    %300 = vmatpush1.msra.mxu0 0.0
    %301 = vmatprep.subr.mxu0 0.0
    %302 = vmatpush1.msra.mxu0 0.0
    %303 = vmatprep.subr.mxu0 0.0
    %304 = vmatpush1.msra.mxu0 0.0
    %305 = vmatprep.subr.mxu0 0.0
    %306 = vmatpush1.msra.mxu0 0.0
    %307 = vmatprep.subr.mxu0 0.0
    %308 = vmatpush1.msra.mxu0 0.0
    %309 = vmatprep.subr.mxu0 0.0
    %310 = vmatpush1.msra.mxu0 0.0
    %311 = vmatprep.subr.mxu0 0.0
    %312 = vmatpush1.msra.mxu0 0.0
    %313 = vmatprep.subr.mxu0 0.0
    %314 = vmatpush1.msra.mxu0 0.0
    %315 = vmatprep.subr.mxu0 0.0
    %316 = vmatpush1.msra.mxu0 0.0
    %317 = vmatprep.subr.mxu0 0.0
    %318 = vmatpush1.msra.mxu0 0.0
    %319 = vmatprep.subr.mxu0 0.0
    %320 = vmatpush1.msra.mxu0 0.0
    %321 = vmatprep.subr.mxu0 0.0
    %322 = vmatpush1.msra.mxu0 0.0
    %323 = vmatprep.subr.mxu0 0.0
    %324 = vmatpush1.msra.mxu0 0.0
    %325 = vmatprep.subr.mxu0 0.0
    %326 = vmatpush1.msra.mxu0 0.0
    %327 = vmatprep.subr.mxu0 0.0
    %328 = vmatpush1.msra.mxu0 0.0
    %329 = vmatprep.subr.mxu0 0.0
    %330 = vmatpush1.msra.mxu0 0.0
    %331 = vmatprep.subr.mxu0 0.0
    %332 = vmatpush1.msra.mxu0 0.0
    %333 = vmatprep.subr.mxu0 0.0
    %334 = vmatpush1.msra.mxu0 0.0
    %335 = vmatprep.subr.mxu0 0.0
    %336 = vmatpush1.msra.mxu0 0.0
    %337 = vmatprep.subr.mxu0 0.0
    %338 = vmatpush1.msra.mxu0 0.0
    %339 = vmatprep.subr.mxu0 0.0
    %340 = vmatpush1.msra.mxu0 0.0
    %341 = vmatprep.subr.mxu0 0.0
    %342 = vmatpush1.msra.mxu0 0.0
    %343 = vmatprep.subr.mxu0 0.0
    %344 = vmatpush1.msra.mxu0 0.0
    %345 = vmatprep.subr.mxu0 0.0
    %346 = vmatpush1.msra.mxu0 0.0
    %347 = vmatprep.subr.mxu0 0.0
    %348 = vmatpush1.msra.mxu0 0.0
    %349 = vmatprep.subr.mxu0 0.0
    %350 = vmatpush1.msra.mxu0 0.0
    %351 = vmatprep.mubr.f32.mxu0 0.0
    %352 = vmatmul.mubr.f32.gmra.mrb[0].mxu0 %v285
    %v353 = vpop.f32.mrb[0].mxu0
    %v354 = vadd.f32 %v281, %v353
    %v355 = vpop.f32.mrb[0].mxu0
    %356 = vdwg.mxu0
    %v357 = vxor.u32 %v354, 2147483648
    %v358 = vmul.f32 %v357, 1.442695
    %v359 = vpow.pop %v358
    %v360 = vadd.f32 %v359, 1.0
    %v361 = vrcp.pop %v360
    %v362 = vmul.f32 1.0, %v361
    %v363 = vld [vmem:[#allocation7] sm:$0xff]
    %v364 = vld [vmem:[#allocation7 + $0x8] sm:$0xff]
    %v365 = vld [vmem:[#allocation11] sm:$0x1]
    %v367 = vlaneseq
    %v368 = vshrl.u32 %v367, 7
    %v369 = vsub.s32 0, %v368
    %v370 = vrot.slane %v365, %v369
    %372 = vmatprep.subr.mxu0 0.0
    %373 = vmatpush1.msra.mxu0 %v363
    %374 = vmatprep.subr.mxu0 0.0
    %375 = vmatpush1.msra.mxu0 %v364
    %376 = vmatprep.subr.mxu0 0.0
    %377 = vmatpush1.msra.mxu0 0.0
    %378 = vmatprep.subr.mxu0 0.0
    %379 = vmatpush1.msra.mxu0 0.0
    %380 = vmatprep.subr.mxu0 0.0
    %381 = vmatpush1.msra.mxu0 0.0
    %382 = vmatprep.subr.mxu0 0.0
    %383 = vmatpush1.msra.mxu0 0.0
    %384 = vmatprep.subr.mxu0 0.0
    %385 = vmatpush1.msra.mxu0 0.0
    %386 = vmatprep.subr.mxu0 0.0
    %387 = vmatpush1.msra.mxu0 0.0
    %388 = vmatprep.subr.mxu0 0.0
    %389 = vmatpush1.msra.mxu0 0.0
    %390 = vmatprep.subr.mxu0 0.0
    %391 = vmatpush1.msra.mxu0 0.0
    %392 = vmatprep.subr.mxu0 0.0
    %393 = vmatpush1.msra.mxu0 0.0
    %394 = vmatprep.subr.mxu0 0.0
    %395 = vmatpush1.msra.mxu0 0.0
    %396 = vmatprep.subr.mxu0 0.0
    %397 = vmatpush1.msra.mxu0 0.0
    %398 = vmatprep.subr.mxu0 0.0
    %399 = vmatpush1.msra.mxu0 0.0
    %400 = vmatprep.subr.mxu0 0.0
    %401 = vmatpush1.msra.mxu0 0.0
    %402 = vmatprep.subr.mxu0 0.0
    %403 = vmatpush1.msra.mxu0 0.0
    %404 = vmatprep.subr.mxu0 0.0
    %405 = vmatpush1.msra.mxu0 0.0
    %406 = vmatprep.subr.mxu0 0.0
    %407 = vmatpush1.msra.mxu0 0.0
    %408 = vmatprep.subr.mxu0 0.0
    %409 = vmatpush1.msra.mxu0 0.0
    %410 = vmatprep.subr.mxu0 0.0
    %411 = vmatpush1.msra.mxu0 0.0
    %412 = vmatprep.subr.mxu0 0.0
    %413 = vmatpush1.msra.mxu0 0.0
    %414 = vmatprep.subr.mxu0 0.0
    %415 = vmatpush1.msra.mxu0 0.0
    %416 = vmatprep.subr.mxu0 0.0
    %417 = vmatpush1.msra.mxu0 0.0
    %418 = vmatprep.subr.mxu0 0.0
    %419 = vmatpush1.msra.mxu0 0.0
    %420 = vmatprep.subr.mxu0 0.0
    %421 = vmatpush1.msra.mxu0 0.0
    %422 = vmatprep.subr.mxu0 0.0
    %423 = vmatpush1.msra.mxu0 0.0
    %424 = vmatprep.subr.mxu0 0.0
    %425 = vmatpush1.msra.mxu0 0.0
    %426 = vmatprep.subr.mxu0 0.0
    %427 = vmatpush1.msra.mxu0 0.0
    %428 = vmatprep.subr.mxu0 0.0
    %429 = vmatpush1.msra.mxu0 0.0
    %430 = vmatprep.subr.mxu0 0.0
    %431 = vmatpush1.msra.mxu0 0.0
    %432 = vmatprep.subr.mxu0 0.0
    %433 = vmatpush1.msra.mxu0 0.0
    %434 = vmatprep.subr.mxu0 0.0
    %435 = vmatpush1.msra.mxu0 0.0
    %436 = vmatprep.mubr.f32.mxu0 0.0
    %437 = vmatmul.mubr.f32.gmra.mrb[0].mxu0 %v285
    %v438 = vpop.f32.mrb[0].mxu0
    %v439 = vadd.f32 %v370, %v438
    %v440 = vpop.f32.mrb[0].mxu0
    %441 = vdwg.mxu0
    %v442 = vxor.u32 %v439, 2147483648
    %v443 = vmul.f32 %v442, 1.442695
    %v444 = vpow.pop %v443
    %v445 = vadd.f32 %v444, 1.0
    %v446 = vrcp.pop %v445
    %v447 = vmul.f32 1.0, %v446
    %v448 = vld [vmem:[#allocation8] sm:$0xff]
    %v449 = vld [vmem:[#allocation8 + $0x8] sm:$0xff]
    %v450 = vld [vmem:[#allocation13] sm:$0x1]
    %v452 = vlaneseq
    %v453 = vshrl.u32 %v452, 7
    %v454 = vsub.s32 0, %v453
    %v455 = vrot.slane %v450, %v454
    %457 = vmatprep.subr.mxu0 0.0
    %458 = vmatpush1.msra.mxu0 %v448
    %459 = vmatprep.subr.mxu0 0.0
    %460 = vmatpush1.msra.mxu0 %v449
    %461 = vmatprep.subr.mxu0 0.0
    %462 = vmatpush1.msra.mxu0 0.0
    %463 = vmatprep.subr.mxu0 0.0
    %464 = vmatpush1.msra.mxu0 0.0
    %465 = vmatprep.subr.mxu0 0.0
    %466 = vmatpush1.msra.mxu0 0.0
    %467 = vmatprep.subr.mxu0 0.0
    %468 = vmatpush1.msra.mxu0 0.0
    %469 = vmatprep.subr.mxu0 0.0
    %470 = vmatpush1.msra.mxu0 0.0
    %471 = vmatprep.subr.mxu0 0.0
    %472 = vmatpush1.msra.mxu0 0.0
    %473 = vmatprep.subr.mxu0 0.0
    %474 = vmatpush1.msra.mxu0 0.0
    %475 = vmatprep.subr.mxu0 0.0
    %476 = vmatpush1.msra.mxu0 0.0
    %477 = vmatprep.subr.mxu0 0.0
    %478 = vmatpush1.msra.mxu0 0.0
    %479 = vmatprep.subr.mxu0 0.0
    %480 = vmatpush1.msra.mxu0 0.0
    %481 = vmatprep.subr.mxu0 0.0
    %482 = vmatpush1.msra.mxu0 0.0
    %483 = vmatprep.subr.mxu0 0.0
    %484 = vmatpush1.msra.mxu0 0.0
    %485 = vmatprep.subr.mxu0 0.0
    %486 = vmatpush1.msra.mxu0 0.0
    %487 = vmatprep.subr.mxu0 0.0
    %488 = vmatpush1.msra.mxu0 0.0
    %489 = vmatprep.subr.mxu0 0.0
    %490 = vmatpush1.msra.mxu0 0.0
    %491 = vmatprep.subr.mxu0 0.0
    %492 = vmatpush1.msra.mxu0 0.0
    %493 = vmatprep.subr.mxu0 0.0
    %494 = vmatpush1.msra.mxu0 0.0
    %495 = vmatprep.subr.mxu0 0.0
    %496 = vmatpush1.msra.mxu0 0.0
    %497 = vmatprep.subr.mxu0 0.0
    %498 = vmatpush1.msra.mxu0 0.0
    %499 = vmatprep.subr.mxu0 0.0
    %500 = vmatpush1.msra.mxu0 0.0
    %501 = vmatprep.subr.mxu0 0.0
    %502 = vmatpush1.msra.mxu0 0.0
    %503 = vmatprep.subr.mxu0 0.0
    %504 = vmatpush1.msra.mxu0 0.0
    %505 = vmatprep.subr.mxu0 0.0
    %506 = vmatpush1.msra.mxu0 0.0
    %507 = vmatprep.subr.mxu0 0.0
    %508 = vmatpush1.msra.mxu0 0.0
    %509 = vmatprep.subr.mxu0 0.0
    %510 = vmatpush1.msra.mxu0 0.0
    %511 = vmatprep.subr.mxu0 0.0
    %512 = vmatpush1.msra.mxu0 0.0
    %513 = vmatprep.subr.mxu0 0.0
    %514 = vmatpush1.msra.mxu0 0.0
    %515 = vmatprep.subr.mxu0 0.0
    %516 = vmatpush1.msra.mxu0 0.0
    %517 = vmatprep.subr.mxu0 0.0
    %518 = vmatpush1.msra.mxu0 0.0
    %519 = vmatprep.subr.mxu0 0.0
    %520 = vmatpush1.msra.mxu0 0.0
    %521 = vmatprep.mubr.f32.mxu0 0.0
    %522 = vmatmul.mubr.f32.gmra.mrb[0].mxu0 %v285
    %v523 = vpop.f32.mrb[0].mxu0
    %v524 = vadd.f32 %v455, %v523
    %v525 = vpop.f32.mrb[0].mxu0
    %526 = vdwg.mxu0
    %v527 = vld [vmem:[#allocation14] sm:$0x1]
    %v529 = vlaneseq
    %v530 = vshrl.u32 %v529, 7
    %v531 = vsub.s32 0, %v530
    %v532 = vrot.slane %v527, %v531
    %v534 = vmul.f32 %v362, %v532
    %v535 = vadd.f32 %v524, %v534
    %v536 = vtanh.pop %v535
    %v537 = vsub.f32 1.0, %v447
    %v538 = vmul.f32 %v537, %v536
    %v539 = vld [vmem:[#allocation16] sm:$0xff]
    %v540 = vld [vmem:[#allocation16 + $0x8] sm:$0xff]
    %v541 = vld [vmem:[#allocation16 + $0x10] sm:$0xff]
    %v542 = vld [vmem:[#allocation16 + $0x18] sm:$0xff]
    %v543 = vld [vmem:[#allocation20] sm:$0x1]
    %v545 = vlaneseq
    %v546 = vshrl.u32 %v545, 7
    %v547 = vsub.s32 0, %v546
    %v548 = vrot.slane %v543, %v547
    %vm550 = vcmask 261120
    %v552 = vsel %vm550, %v538, 0
    %554 = vmatprep.subr.mxu0 0.0
    %555 = vmatpush1.msra.mxu0 %v539
    %556 = vmatprep.subr.mxu0 0.0
    %557 = vmatpush1.msra.mxu0 %v540
    %558 = vmatprep.subr.mxu0 0.0
    %559 = vmatpush1.msra.mxu0 %v541
    %560 = vmatprep.subr.mxu0 0.0
    %561 = vmatpush1.msra.mxu0 %v542
    %562 = vmatprep.subr.mxu0 0.0
    %563 = vmatpush1.msra.mxu0 0.0
    %564 = vmatprep.subr.mxu0 0.0
    %565 = vmatpush1.msra.mxu0 0.0
    %566 = vmatprep.subr.mxu0 0.0
    %567 = vmatpush1.msra.mxu0 0.0
    %568 = vmatprep.subr.mxu0 0.0
    %569 = vmatpush1.msra.mxu0 0.0
    %570 = vmatprep.subr.mxu0 0.0
    %571 = vmatpush1.msra.mxu0 0.0
    %572 = vmatprep.subr.mxu0 0.0
    %573 = vmatpush1.msra.mxu0 0.0
    %574 = vmatprep.subr.mxu0 0.0
    %575 = vmatpush1.msra.mxu0 0.0
    %576 = vmatprep.subr.mxu0 0.0
    %577 = vmatpush1.msra.mxu0 0.0
    %578 = vmatprep.subr.mxu0 0.0
    %579 = vmatpush1.msra.mxu0 0.0
    %580 = vmatprep.subr.mxu0 0.0
    %581 = vmatpush1.msra.mxu0 0.0
    %582 = vmatprep.subr.mxu0 0.0
    %583 = vmatpush1.msra.mxu0 0.0
    %584 = vmatprep.subr.mxu0 0.0
    %585 = vmatpush1.msra.mxu0 0.0
    %586 = vmatprep.subr.mxu0 0.0
    %587 = vmatpush1.msra.mxu0 0.0
    %588 = vmatprep.subr.mxu0 0.0
    %589 = vmatpush1.msra.mxu0 0.0
    %590 = vmatprep.subr.mxu0 0.0
    %591 = vmatpush1.msra.mxu0 0.0
    %592 = vmatprep.subr.mxu0 0.0
    %593 = vmatpush1.msra.mxu0 0.0
    %594 = vmatprep.subr.mxu0 0.0
    %595 = vmatpush1.msra.mxu0 0.0
    %596 = vmatprep.subr.mxu0 0.0
    %597 = vmatpush1.msra.mxu0 0.0
    %598 = vmatprep.subr.mxu0 0.0
    %599 = vmatpush1.msra.mxu0 0.0
    %600 = vmatprep.subr.mxu0 0.0
    %601 = vmatpush1.msra.mxu0 0.0
    %602 = vmatprep.subr.mxu0 0.0
    %603 = vmatpush1.msra.mxu0 0.0
    %604 = vmatprep.subr.mxu0 0.0
    %605 = vmatpush1.msra.mxu0 0.0
    %606 = vmatprep.subr.mxu0 0.0
    %607 = vmatpush1.msra.mxu0 0.0
    %608 = vmatprep.subr.mxu0 0.0
    %609 = vmatpush1.msra.mxu0 0.0
    %610 = vmatprep.subr.mxu0 0.0
    %611 = vmatpush1.msra.mxu0 0.0
    %612 = vmatprep.subr.mxu0 0.0
    %613 = vmatpush1.msra.mxu0 0.0
    %614 = vmatprep.subr.mxu0 0.0
    %615 = vmatpush1.msra.mxu0 0.0
    %616 = vmatprep.subr.mxu0 0.0
    %617 = vmatpush1.msra.mxu0 0.0
    %618 = vmatprep.mubr.f32.mxu0 0.0
    %619 = vmatmul.mubr.f32.gmra.mrb[0].mxu0 %v552
    %v620 = vpop.f32.mrb[0].mxu0
    %v621 = vadd.f32 %v548, %v620
    %v622 = vpop.f32.mrb[0].mxu0
    %623 = vdwg.mxu0
    %v624 = vxor.u32 %v621, 2147483648
    %v625 = vmul.f32 %v624, 1.442695
    %v626 = vpow.pop %v625
    %v627 = vadd.f32 %v626, 1.0
    %v628 = vrcp.pop %v627
    %v629 = vmul.f32 1.0, %v628
    %v630 = vld [vmem:[#allocation17] sm:$0xff]
    %v631 = vld [vmem:[#allocation17 + $0x8] sm:$0xff]
    %v632 = vld [vmem:[#allocation17 + $0x10] sm:$0xff]
    %v633 = vld [vmem:[#allocation17 + $0x18] sm:$0xff]
    %v634 = vld [vmem:[#allocation22] sm:$0x1]
    %v636 = vlaneseq
    %v637 = vshrl.u32 %v636, 7
    %v638 = vsub.s32 0, %v637
    %v639 = vrot.slane %v634, %v638
    %641 = vmatprep.subr.mxu0 0.0
    %642 = vmatpush1.msra.mxu0 %v630
    %643 = vmatprep.subr.mxu0 0.0
    %644 = vmatpush1.msra.mxu0 %v631
    %645 = vmatprep.subr.mxu0 0.0
    %646 = vmatpush1.msra.mxu0 %v632
    %647 = vmatprep.subr.mxu0 0.0
    %648 = vmatpush1.msra.mxu0 %v633
    %649 = vmatprep.subr.mxu0 0.0
    %650 = vmatpush1.msra.mxu0 0.0
    %651 = vmatprep.subr.mxu0 0.0
    %652 = vmatpush1.msra.mxu0 0.0
    %653 = vmatprep.subr.mxu0 0.0
    %654 = vmatpush1.msra.mxu0 0.0
    %655 = vmatprep.subr.mxu0 0.0
    %656 = vmatpush1.msra.mxu0 0.0
    %657 = vmatprep.subr.mxu0 0.0
    %658 = vmatpush1.msra.mxu0 0.0
    %659 = vmatprep.subr.mxu0 0.0
    %660 = vmatpush1.msra.mxu0 0.0
    %661 = vmatprep.subr.mxu0 0.0
    %662 = vmatpush1.msra.mxu0 0.0
    %663 = vmatprep.subr.mxu0 0.0
    %664 = vmatpush1.msra.mxu0 0.0
    %665 = vmatprep.subr.mxu0 0.0
    %666 = vmatpush1.msra.mxu0 0.0
    %667 = vmatprep.subr.mxu0 0.0
    %668 = vmatpush1.msra.mxu0 0.0
    %669 = vmatprep.subr.mxu0 0.0
    %670 = vmatpush1.msra.mxu0 0.0
    %671 = vmatprep.subr.mxu0 0.0
    %672 = vmatpush1.msra.mxu0 0.0
    %673 = vmatprep.subr.mxu0 0.0
    %674 = vmatpush1.msra.mxu0 0.0
    %675 = vmatprep.subr.mxu0 0.0
    %676 = vmatpush1.msra.mxu0 0.0
    %677 = vmatprep.subr.mxu0 0.0
    %678 = vmatpush1.msra.mxu0 0.0
    %679 = vmatprep.subr.mxu0 0.0
    %680 = vmatpush1.msra.mxu0 0.0
    %681 = vmatprep.subr.mxu0 0.0
    %682 = vmatpush1.msra.mxu0 0.0
    %683 = vmatprep.subr.mxu0 0.0
    %684 = vmatpush1.msra.mxu0 0.0
    %685 = vmatprep.subr.mxu0 0.0
    %686 = vmatpush1.msra.mxu0 0.0
    %687 = vmatprep.subr.mxu0 0.0
    %688 = vmatpush1.msra.mxu0 0.0
    %689 = vmatprep.subr.mxu0 0.0
    %690 = vmatpush1.msra.mxu0 0.0
    %691 = vmatprep.subr.mxu0 0.0
    %692 = vmatpush1.msra.mxu0 0.0
    %693 = vmatprep.subr.mxu0 0.0
    %694 = vmatpush1.msra.mxu0 0.0
    %695 = vmatprep.subr.mxu0 0.0
    %696 = vmatpush1.msra.mxu0 0.0
    %697 = vmatprep.subr.mxu0 0.0
    %698 = vmatpush1.msra.mxu0 0.0
    %699 = vmatprep.subr.mxu0 0.0
    %700 = vmatpush1.msra.mxu0 0.0
    %701 = vmatprep.subr.mxu0 0.0
    %702 = vmatpush1.msra.mxu0 0.0
    %703 = vmatprep.subr.mxu0 0.0
    %704 = vmatpush1.msra.mxu0 0.0
    %705 = vmatprep.mubr.f32.mxu0 0.0
    %706 = vmatmul.mubr.f32.gmra.mrb[0].mxu0 %v552
    %v707 = vpop.f32.mrb[0].mxu0
    %v708 = vadd.f32 %v639, %v707
    %v709 = vpop.f32.mrb[0].mxu0
    %710 = vdwg.mxu0
    %v711 = vxor.u32 %v708, 2147483648
    %v712 = vmul.f32 %v711, 1.442695
    %v713 = vpow.pop %v712
    %v714 = vadd.f32 %v713, 1.0
    %v715 = vrcp.pop %v714
    %v716 = vmul.f32 1.0, %v715
    %v717 = vld [vmem:[#allocation19] sm:$0xff]
    %v718 = vld [vmem:[#allocation19 + $0x8] sm:$0xff]
    %v719 = vld [vmem:[#allocation19 + $0x10] sm:$0xff]
    %v720 = vld [vmem:[#allocation19 + $0x18] sm:$0xff]
    %v721 = vld [vmem:[#allocation23] sm:$0x1]
    %v723 = vlaneseq
    %v724 = vshrl.u32 %v723, 7
    %v725 = vsub.s32 0, %v724
    %v726 = vrot.slane %v721, %v725
    %728 = vmatprep.subr.mxu0 0.0
    %729 = vmatpush1.msra.mxu0 %v717
    %730 = vmatprep.subr.mxu0 0.0
    %731 = vmatpush1.msra.mxu0 %v718
    %732 = vmatprep.subr.mxu0 0.0
    %733 = vmatpush1.msra.mxu0 %v719
    %734 = vmatprep.subr.mxu0 0.0
    %735 = vmatpush1.msra.mxu0 %v720
    %736 = vmatprep.subr.mxu0 0.0
    %737 = vmatpush1.msra.mxu0 0.0
    %738 = vmatprep.subr.mxu0 0.0
    %739 = vmatpush1.msra.mxu0 0.0
    %740 = vmatprep.subr.mxu0 0.0
    %741 = vmatpush1.msra.mxu0 0.0
    %742 = vmatprep.subr.mxu0 0.0
    %743 = vmatpush1.msra.mxu0 0.0
    %744 = vmatprep.subr.mxu0 0.0
    %745 = vmatpush1.msra.mxu0 0.0
    %746 = vmatprep.subr.mxu0 0.0
    %747 = vmatpush1.msra.mxu0 0.0
    %748 = vmatprep.subr.mxu0 0.0
    %749 = vmatpush1.msra.mxu0 0.0
    %750 = vmatprep.subr.mxu0 0.0
    %751 = vmatpush1.msra.mxu0 0.0
    %752 = vmatprep.subr.mxu0 0.0
    %753 = vmatpush1.msra.mxu0 0.0
    %754 = vmatprep.subr.mxu0 0.0
    %755 = vmatpush1.msra.mxu0 0.0
    %756 = vmatprep.subr.mxu0 0.0
    %757 = vmatpush1.msra.mxu0 0.0
    %758 = vmatprep.subr.mxu0 0.0
    %759 = vmatpush1.msra.mxu0 0.0
    %760 = vmatprep.subr.mxu0 0.0
    %761 = vmatpush1.msra.mxu0 0.0
    %762 = vmatprep.subr.mxu0 0.0
    %763 = vmatpush1.msra.mxu0 0.0
    %764 = vmatprep.subr.mxu0 0.0
    %765 = vmatpush1.msra.mxu0 0.0
    %766 = vmatprep.subr.mxu0 0.0
    %767 = vmatpush1.msra.mxu0 0.0
    %768 = vmatprep.subr.mxu0 0.0
    %769 = vmatpush1.msra.mxu0 0.0
    %770 = vmatprep.subr.mxu0 0.0
    %771 = vmatpush1.msra.mxu0 0.0
    %772 = vmatprep.subr.mxu0 0.0
    %773 = vmatpush1.msra.mxu0 0.0
    %774 = vmatprep.subr.mxu0 0.0
    %775 = vmatpush1.msra.mxu0 0.0
    %776 = vmatprep.subr.mxu0 0.0
    %777 = vmatpush1.msra.mxu0 0.0
    %778 = vmatprep.subr.mxu0 0.0
    %779 = vmatpush1.msra.mxu0 0.0
    %780 = vmatprep.subr.mxu0 0.0
    %781 = vmatpush1.msra.mxu0 0.0
    %782 = vmatprep.subr.mxu0 0.0
    %783 = vmatpush1.msra.mxu0 0.0
    %784 = vmatprep.subr.mxu0 0.0
    %785 = vmatpush1.msra.mxu0 0.0
    %786 = vmatprep.subr.mxu0 0.0
    %787 = vmatpush1.msra.mxu0 0.0
    %788 = vmatprep.subr.mxu0 0.0
    %789 = vmatpush1.msra.mxu0 0.0
    %790 = vmatprep.subr.mxu0 0.0
    %791 = vmatpush1.msra.mxu0 0.0
    %792 = vmatprep.mubr.f32.mxu0 0.0
    %793 = vmatmul.mubr.f32.gmra.mrb[0].mxu0 %v552
    %v794 = vpop.f32.mrb[0].mxu0
    %v795 = vadd.f32 %v726, %v794
    %v796 = vpop.f32.mrb[0].mxu0
    %797 = vdwg.mxu0
    %v798 = vld [vmem:[#allocation25] sm:$0x1]
    %v800 = vlaneseq
    %v801 = vshrl.u32 %v800, 7
    %v802 = vsub.s32 0, %v801
    %v803 = vrot.slane %v798, %v802
    %v805 = vmul.f32 %v629, %v803
    %v806 = vadd.f32 %v795, %v805
    %v807 = vtanh.pop %v806
    %v808 = vsub.f32 1.0, %v716
    %v809 = vmul.f32 %v808, %v807
    %v810 = vld [vmem:[#allocation26] sm:$0xff]
    %v811 = vld [vmem:[#allocation26 + $0x8] sm:$0xff]
    %v812 = vld [vmem:[#allocation26 + $0x10] sm:$0xff]
    %v813 = vld [vmem:[#allocation26 + $0x18] sm:$0xff]
    %v814 = vld [vmem:[#allocation28] sm:$0x1]
    %v816 = vlaneseq
    %v817 = vshrl.u32 %v816, 7
    %v818 = vsub.s32 0, %v817
    %v819 = vrot.slane %v814, %v818
    %v822 = vsel %vm550, %v809, 0
    %824 = vmatprep.subr.mxu0 0.0
    %825 = vmatpush1.msra.mxu0 %v810
    %826 = vmatprep.subr.mxu0 0.0
    %827 = vmatpush1.msra.mxu0 %v811
    %828 = vmatprep.subr.mxu0 0.0
    %829 = vmatpush1.msra.mxu0 %v812
    %830 = vmatprep.subr.mxu0 0.0
    %831 = vmatpush1.msra.mxu0 %v813
    %832 = vmatprep.subr.mxu0 0.0
    %833 = vmatpush1.msra.mxu0 0.0
    %834 = vmatprep.subr.mxu0 0.0
    %835 = vmatpush1.msra.mxu0 0.0
    %836 = vmatprep.subr.mxu0 0.0
    %837 = vmatpush1.msra.mxu0 0.0
    %838 = vmatprep.subr.mxu0 0.0
    %839 = vmatpush1.msra.mxu0 0.0
    %840 = vmatprep.subr.mxu0 0.0
    %841 = vmatpush1.msra.mxu0 0.0
    %842 = vmatprep.subr.mxu0 0.0
    %843 = vmatpush1.msra.mxu0 0.0
    %844 = vmatprep.subr.mxu0 0.0
    %845 = vmatpush1.msra.mxu0 0.0
    %846 = vmatprep.subr.mxu0 0.0
    %847 = vmatpush1.msra.mxu0 0.0
    %848 = vmatprep.subr.mxu0 0.0
    %849 = vmatpush1.msra.mxu0 0.0
    %850 = vmatprep.subr.mxu0 0.0
    %851 = vmatpush1.msra.mxu0 0.0
    %852 = vmatprep.subr.mxu0 0.0
    %853 = vmatpush1.msra.mxu0 0.0
    %854 = vmatprep.subr.mxu0 0.0
    %855 = vmatpush1.msra.mxu0 0.0
    %856 = vmatprep.subr.mxu0 0.0
    %857 = vmatpush1.msra.mxu0 0.0
    %858 = vmatprep.subr.mxu0 0.0
    %859 = vmatpush1.msra.mxu0 0.0
    %860 = vmatprep.subr.mxu0 0.0
    %861 = vmatpush1.msra.mxu0 0.0
    %862 = vmatprep.subr.mxu0 0.0
    %863 = vmatpush1.msra.mxu0 0.0
    %864 = vmatprep.subr.mxu0 0.0
    %865 = vmatpush1.msra.mxu0 0.0
    %866 = vmatprep.subr.mxu0 0.0
    %867 = vmatpush1.msra.mxu0 0.0
    %868 = vmatprep.subr.mxu0 0.0
    %869 = vmatpush1.msra.mxu0 0.0
    %870 = vmatprep.subr.mxu0 0.0
    %871 = vmatpush1.msra.mxu0 0.0
    %872 = vmatprep.subr.mxu0 0.0
    %873 = vmatpush1.msra.mxu0 0.0
    %874 = vmatprep.subr.mxu0 0.0
    %875 = vmatpush1.msra.mxu0 0.0
    %876 = vmatprep.subr.mxu0 0.0
    %877 = vmatpush1.msra.mxu0 0.0
    %878 = vmatprep.subr.mxu0 0.0
    %879 = vmatpush1.msra.mxu0 0.0
    %880 = vmatprep.subr.mxu0 0.0
    %881 = vmatpush1.msra.mxu0 0.0
    %882 = vmatprep.subr.mxu0 0.0
    %883 = vmatpush1.msra.mxu0 0.0
    %884 = vmatprep.subr.mxu0 0.0
    %885 = vmatpush1.msra.mxu0 0.0
    %886 = vmatprep.subr.mxu0 0.0
    %887 = vmatpush1.msra.mxu0 0.0
    %888 = vmatprep.mubr.f32.mxu0 0.0
    %889 = vmatmul.mubr.f32.gmra.mrb[0].mxu0 %v822
    %v890 = vpop.f32.mrb[0].mxu0
    %v891 = vadd.f32 %v819, %v890
    %v892 = vpop.f32.mrb[0].mxu0
    %893 = vdwg.mxu0
    %v894 = vmax.f32 %v891, 0.0
    %v895 = vld [vmem:[%s17] sm:$0xff]
    %v896 = vld [vmem:[%s17 + $0x8] sm:$0xff]
    %v897 = vld [vmem:[%s17 + $0x10] sm:$0xff]
    %v898 = vld [vmem:[%s17 + $0x18] sm:$0xff]
    %v899 = vld [vmem:[%s17 + $0x20] sm:$0xff]
    %v900 = vld [vmem:[%s17 + $0x28] sm:$0xff]
    %v901 = vld [vmem:[%s17 + $0x30] sm:$0xff]
    %v902 = vld [vmem:[%s17 + $0x38] sm:$0xff]
    %v903 = vld [vmem:[%s18] sm:$0x1]
    %v905 = vlaneseq
    %v906 = vshrl.u32 %v905, 7
    %v907 = vsub.s32 0, %v906
    %v908 = vrot.slane %v903, %v907
    %vm910 = vcmask 523264
    %v912 = vsel %vm910, %v894, 0
    %914 = vmatprep.subr.mxu0 0.0
    %915 = vmatpush1.msra.mxu0 %v895
    %916 = vmatprep.subr.mxu0 0.0
    %917 = vmatpush1.msra.mxu0 %v896
    %918 = vmatprep.subr.mxu0 0.0
    %919 = vmatpush1.msra.mxu0 %v897
    %920 = vmatprep.subr.mxu0 0.0
    %921 = vmatpush1.msra.mxu0 %v898
    %922 = vmatprep.subr.mxu0 0.0
    %923 = vmatpush1.msra.mxu0 %v899
    %924 = vmatprep.subr.mxu0 0.0
    %925 = vmatpush1.msra.mxu0 %v900
    %926 = vmatprep.subr.mxu0 0.0
    %927 = vmatpush1.msra.mxu0 %v901
    %928 = vmatprep.subr.mxu0 0.0
    %929 = vmatpush1.msra.mxu0 %v902
    %930 = vmatprep.subr.mxu0 0.0
    %931 = vmatpush1.msra.mxu0 0.0
    %932 = vmatprep.subr.mxu0 0.0
    %933 = vmatpush1.msra.mxu0 0.0
    %934 = vmatprep.subr.mxu0 0.0
    %935 = vmatpush1.msra.mxu0 0.0
    %936 = vmatprep.subr.mxu0 0.0
    %937 = vmatpush1.msra.mxu0 0.0
    %938 = vmatprep.subr.mxu0 0.0
    %939 = vmatpush1.msra.mxu0 0.0
    %940 = vmatprep.subr.mxu0 0.0
    %941 = vmatpush1.msra.mxu0 0.0
    %942 = vmatprep.subr.mxu0 0.0
    %943 = vmatpush1.msra.mxu0 0.0
    %944 = vmatprep.subr.mxu0 0.0
    %945 = vmatpush1.msra.mxu0 0.0
    %946 = vmatprep.subr.mxu0 0.0
    %947 = vmatpush1.msra.mxu0 0.0
    %948 = vmatprep.subr.mxu0 0.0
    %949 = vmatpush1.msra.mxu0 0.0
    %950 = vmatprep.subr.mxu0 0.0
    %951 = vmatpush1.msra.mxu0 0.0
    %952 = vmatprep.subr.mxu0 0.0
    %953 = vmatpush1.msra.mxu0 0.0
    %954 = vmatprep.subr.mxu0 0.0
    %955 = vmatpush1.msra.mxu0 0.0
    %956 = vmatprep.subr.mxu0 0.0
    %957 = vmatpush1.msra.mxu0 0.0
    %958 = vmatprep.subr.mxu0 0.0
    %959 = vmatpush1.msra.mxu0 0.0
    %960 = vmatprep.subr.mxu0 0.0
    %961 = vmatpush1.msra.mxu0 0.0
    %962 = vmatprep.subr.mxu0 0.0
    %963 = vmatpush1.msra.mxu0 0.0
    %964 = vmatprep.subr.mxu0 0.0
    %965 = vmatpush1.msra.mxu0 0.0
    %966 = vmatprep.subr.mxu0 0.0
    %967 = vmatpush1.msra.mxu0 0.0
    %968 = vmatprep.subr.mxu0 0.0
    %969 = vmatpush1.msra.mxu0 0.0
    %970 = vmatprep.subr.mxu0 0.0
    %971 = vmatpush1.msra.mxu0 0.0
    %972 = vmatprep.subr.mxu0 0.0
    %973 = vmatpush1.msra.mxu0 0.0
    %974 = vmatprep.subr.mxu0 0.0
    %975 = vmatpush1.msra.mxu0 0.0
    %976 = vmatprep.subr.mxu0 0.0
    %977 = vmatpush1.msra.mxu0 0.0
    %978 = vmatprep.mubr.f32.mxu0 0.0
    %979 = vmatmul.mubr.f32.gmra.mrb[0].mxu0 %v912
    %v980 = vpop.f32.mrb[0].mxu0
    %v981 = vadd.f32 %v908, %v980
    %v982 = vpop.f32.mrb[0].mxu0
    %983 = vdwg.mxu0
    %984 = vst [vmem:[#allocation29] sm:$0xff] %v981
    // Predicated region
    $region146: #{tpu_custom_call.1} parent=1 // pred_check
      _
    $region147: #{tpu_custom_call.1} parent=1 // pred_check_branch
      %986 = sbr.rel (0) target = $region149
    $region148: #{tpu_custom_call.1} parent=1 // pred_region
      %s988 = ssub.s32 128, 128
      %989 = vsyncadd [#allocation4], %s988
      %s991 = sshll.u32 [#allocation29], 4
      %s992 = int_to_ptr.vmem [resolvable:$true] %s991
      %994 = dma.vmem_to_hbm [thread:$0]  %s992, 128, %s19, [#allocation4]
    $region149: #{tpu_custom_call.1} parent=1 // pred_fallthru
      _
    // Predicated region
    $region150: #{tpu_custom_call.1} parent=1 // pred_check
      _
    $region151: #{tpu_custom_call.1} parent=1 // pred_check_branch
      %996 = sbr.rel (0) target = $region153
    $region152: #{tpu_custom_call.1} parent=1 // pred_region
      %997 = dma.done [#allocation4], 128
    $region153: #{tpu_custom_call.1} parent=1 // pred_fallthru
      _
    %998 = vsyncpa [#allocation3], 1
    %999 = vsyncpa [#allocation6], 1
    %1000 = vsyncpa [#allocation9], 1
    %1001 = vsyncpa [#allocation12], 1
    %1002 = vsyncpa [#allocation15], 1
    %1003 = vsyncpa [#allocation18], 1
    %1004 = vsyncpa [#allocation21], 1
    %1005 = vsyncpa [#allocation24], 1
    %1006 = vsyncpa [#allocation27], 1
    %1007 = vsyncpa [#allocation4], 1

</llo_original>
